<compile_context>
chip_gen: v6e
topology: v6e:2x2x1
jax: 0.10.0
libtpu: 0.0.40
codegen_flags: <defaults>
</compile_context>

<pallas_src>
import functools

import jax
import jax.numpy as jnp
from jax.experimental import pallas as pl
from jax.experimental.pallas import tpu as pltpu


_MIB = 1024 * 1024
# ~4 MiB (f32-equivalent) input tile per grid step: measured 2-4 MiB tiles
# reach ~85-86% of HBM roofline for a pure streaming kernel.
_TARGET_TILE_BYTES = 4 * _MIB
# Never shrink a tile below ~2 MiB when splitting work across TensorCores.
_MIN_TILE_BYTES = 2 * _MIB


def _layernorm_kernel(gamma_ref, beta_ref, x_ref, o_ref, *, eps: float, d_valid: int):
    """LayerNorm over the last (lane) dim of a (ROWS, D_pad) block.

    Lanes >= d_valid are wrapper padding (lane-density guard); they are
    excluded from the mean/std reductions and their outputs are sliced off
    outside the kernel.
    """
    x = x_ref[...].astype(jnp.float32)
    d_pad = x.shape[-1]
    if d_valid != d_pad:
        lane = jax.lax.broadcasted_iota(jnp.int32, x.shape, dimension=x.ndim - 1)
        valid = lane < d_valid
        x = jnp.where(valid, x, 0.0)

    mean = jnp.sum(x, axis=-1, keepdims=True) * jnp.float32(1.0 / d_valid)
    diff = x - mean
    if d_valid != d_pad:
        diff = jnp.where(valid, diff, 0.0)

    # torch.std defaults to the unbiased (Bessel-corrected) estimator (D-1).
    # d_valid == 1 degenerates to NaN, matching torch semantics.
    inv_dm1 = 1.0 / (d_valid - 1) if d_valid > 1 else float("nan")
    var = jnp.sum(diff * diff, axis=-1, keepdims=True) * jnp.float32(inv_dm1)
    std = jnp.sqrt(var)

    # Per-row reciprocal of the (ROWS, 1) column (EUP slot) instead of a
    # full-tile (ROWS, D) vector divide on the VALU.  Exact (approx=False):
    # the kernel is DMA-bound, so the exact form costs nothing extra and
    # keeps the 1e-5 tolerance / std+eps semantics.
    inv = pl.reciprocal(std + jnp.float32(eps), approx=False)
    scale = gamma_ref[0] * inv                       # (ROWS, 1)
    out = diff * scale + beta_ref[0]
    o_ref[...] = out.astype(o_ref.dtype)


def _sublane_multiple(dtype) -> int:
    itemsize = jnp.dtype(dtype).itemsize
    # f32 -> 8, bf16 -> 16, int8/fp8 -> 32 (packed sublanes per vreg).
    return max(8, 32 // max(1, itemsize))


@functools.lru_cache(maxsize=1)
def _tpu_hw_info():
    """Returns (physical VMEM bytes per core, TensorCores sharing the grid)."""
    kind = ""
    try:
        kind = (jax.devices()[0].device_kind or "").lower()
    except Exception:
        pass

    vmem_bytes = None
    try:
        vmem_bytes = int(pltpu.get_tpu_info().vmem_capacity_bytes)
    except Exception:
        vmem_bytes = None

    is_v7 = ("v7" in kind) or (vmem_bytes is not None and vmem_bytes <= 64 * _MIB)
    if vmem_bytes is None:
        if is_v7:
            vmem_bytes = 64 * _MIB
        elif ("v5" in kind) or ("v6" in kind):
            vmem_bytes = 128 * _MIB
        else:
            vmem_bytes = 64 * _MIB        # conservative fallback

    num_cores = 2 if is_v7 else 1         # v7x: 2 TCs/chip; v5e/v6e: 1
    return vmem_bytes, num_cores


def _vmem_limit_bytes(vmem_capacity: int) -> int:
    # ~5/8 of physical VMEM, clamped to [32, 96] MiB: 80 MiB on 128-MiB chips
    # (v5e/v6e), 40 MiB on v7x (64 MiB physical).  Leaves headroom for
    # Mosaic's internal scratch and the surrounding XLA program.
    return int(max(32 * _MIB, min(96 * _MIB, (vmem_capacity * 5) // 8)))


def _choose_block_rows(n_rows: int, d_pad: int, dtype,
                       vmem_limit: int, num_cores: int) -> int:
    """Largest sublane-aligned row tile that fits the VMEM budget."""
    sub = _sublane_multiple(dtype)
    if n_rows <= sub:
        # Block dim equals the full array dim (allowed without (8,128) align).
        return n_rows

    itemsize = jnp.dtype(dtype).itemsize
    # Per tile-row bytes in VMEM: double-buffered input + double-buffered
    # output (input dtype) plus ~3 full-tile f32 temporaries kept live by the
    # kernel body (upcast x, centered diff, pre-cast output).
    per_row_bytes = d_pad * (4 * itemsize + 3 * 4)
    usable = (vmem_limit * 3) // 4
    rows_vmem = (usable // per_row_bytes) // sub * sub

    # Bytes-based target: ~4 MiB of f32-equivalent input tile per step.
    rows_target = (_TARGET_TILE_BYTES // (d_pad * 4)) // sub * sub

    cap = max(sub, min(rows_vmem, rows_target))

    if num_cores > 1:
        # v7x only: give each TensorCore >= 4 pipelined steps so input DMA of
        # step i+1 overlaps output writeback of step i, but never shrink a
        # tile below ~2 MiB (step overhead would dominate at 3.2 TB/s HBM).
        rows_split = -(-n_rows // (4 * num_cores))
        rows_split = -(-rows_split // sub) * sub
        rows_min = max(sub, (_MIN_TILE_BYTES // (d_pad * 4)) // sub * sub)
        cap = min(cap, max(rows_split, rows_min))

    rows_floor = max(sub, (n_rows // sub) * sub)
    return max(sub, min(cap, rows_floor))


def layer_normalization(x: jax.Array, gamma: jax.Array, beta: jax.Array,
                        eps: float = 1e-6, *, block_rows: int | None = None) -> jax.Array:
    """Pallas LayerNormalization matching the PyTorch module semantics.

    x: (..., D). gamma, beta: shape (1,) scalar parameters.
    """
    orig_shape = x.shape
    d = orig_shape[-1]
    x2 = x.reshape(-1, d)                # collapse leading dims
    n_rows = x2.shape[0]

    # Lane-density guard: pad the last dim to a multiple of 128 in the
    # wrapper (sliced afterwards) so the output stores stay unmasked; the
    # kernel masks padded lanes out of the reductions.
    d_pad = -(-d // 128) * 128
    if d_pad != d:
        x2 = jnp.pad(x2, ((0, 0), (0, d_pad - d)))

    vmem_capacity, num_cores = _tpu_hw_info()
    vmem_limit = _vmem_limit_bytes(vmem_capacity)

    if block_rows is None:
        block_rows = _choose_block_rows(n_rows, d_pad, x2.dtype, vmem_limit, num_cores)

    grid = (pl.cdiv(n_rows, block_rows),)   # partial last block is masked by Pallas

    out = pl.pallas_call(
        functools.partial(_layernorm_kernel, eps=eps, d_valid=d),
        out_shape=jax.ShapeDtypeStruct((n_rows, d_pad), x.dtype),
        grid_spec=pltpu.PrefetchScalarGridSpec(
            num_scalar_prefetch=0,
            grid=grid,
            in_specs=[
                pl.BlockSpec(memory_space=pltpu.MemorySpace.SMEM),  # gamma (1,)
                pl.BlockSpec(memory_space=pltpu.MemorySpace.SMEM),  # beta  (1,)
                pl.BlockSpec((block_rows, d_pad), lambda i: (i, 0)),
            ],
            out_specs=pl.BlockSpec((block_rows, d_pad), lambda i: (i, 0)),
        ),
        compiler_params=pltpu.CompilerParams(
            dimension_semantics=("parallel",),
            vmem_limit_bytes=vmem_limit,
        ),
    )(gamma.astype(jnp.float32), beta.astype(jnp.float32), x2)

    if d_pad != d:
        out = out[:, :d]
    return out.reshape(orig_shape)


class Encoder:
    """JAX counterpart of the PyTorch Encoder module."""

    def __init__(self, layers=()):
        # `layers` are callables taking (x, src_mask) -> x. The reference
        # module leaves their definition external; default is an empty list.
        self.layers = tuple(layers)
        self.eps = 1e-6
        # nn.Parameter(torch.ones(1)) / torch.zeros(1)
        self.gamma = jnp.ones((1,), jnp.float32)
        self.beta = jnp.zeros((1,), jnp.float32)

    def __call__(self, x, src_mask):
        for layer in self.layers:
            x = layer(x, src_mask)
        return layer_normalization(x, self.gamma, self.beta, self.eps)


def _reference_layernorm(x, gamma, beta, eps=1e-6):
    x = x.astype(jnp.float32)
    mean = jnp.mean(x, axis=-1, keepdims=True)
    std = jnp.std(x, axis=-1, keepdims=True, ddof=1)  # unbiased, like torch
    return gamma * (x - mean) / (std + eps) + beta


if __name__ == "__main__":
    key = jax.random.PRNGKey(0)
    # Small but lane-dense test shape: d_model = 128 keeps output stores
    # unmasked; n_rows = 16.
    batch, seq, d_model = 2, 8, 128
    x = jax.random.normal(key, (batch, seq, d_model), dtype=jnp.float32)
    src_mask = jnp.ones((batch, 1, 1, seq), dtype=jnp.float32)  # unused (no layers)

    enc = Encoder(layers=())
    out = enc(x, src_mask)
    out = jax.block_until_ready(out)

    ref = _reference_layernorm(x, enc.gamma, enc.beta, enc.eps)
    assert out.shape == x.shape, (out.shape, x.shape)
    assert jnp.allclose(out, ref, atol=1e-5, rtol=1e-5), "mismatch vs reference"

    # Non-divisible row count (partial last block is masked, no row padding).
    x_odd = jax.random.normal(jax.random.PRNGKey(1), (3, 7, d_model), jnp.float32)
    out_odd = jax.block_until_ready(
        layer_normalization(x_odd, enc.gamma, enc.beta, enc.eps))
    ref_odd = _reference_layernorm(x_odd, enc.gamma, enc.beta, enc.eps)
    assert jnp.allclose(out_odd, ref_odd, atol=1e-5, rtol=1e-5), "partial-block mismatch"

    # d_model not a multiple of 128: exercises the lane-padding guard
    # (padded lanes masked out of the mean/std reductions, sliced afterwards).
    x_pad = jax.random.normal(jax.random.PRNGKey(2), (2, 5, 96), jnp.float32)
    out_pad = jax.block_until_ready(
        layer_normalization(x_pad, enc.gamma, enc.beta, enc.eps))
    ref_pad = _reference_layernorm(x_pad, enc.gamma, enc.beta, enc.eps)
    assert out_pad.shape == x_pad.shape, (out_pad.shape, x_pad.shape)
    assert jnp.allclose(out_pad, ref_pad, atol=1e-5, rtol=1e-5), "lane-pad mismatch"

    print("KERNEL_OK")
</pallas_src>

<mosaic_0001>
module attributes {stable_mosaic.version = 11 : i64} {
  func.func @_layernorm_kernel(%arg0: i32, %arg1: memref<1xf32, #tpu.memory_space<smem>>, %arg2: memref<1xf32, #tpu.memory_space<smem>>, %arg3: memref<16x128xf32, #tpu.memory_space<vmem>>, %arg4: memref<16x128xf32, #tpu.memory_space<vmem>>) attributes {dimension_semantics = [#tpu.dimension_semantics<parallel>], iteration_bounds = array<i64: 1>, scalar_prefetch = 0 : i64, scratch_operands = 0 : i64, tpu.core_type = #tpu.core_type<tc>, window_params = [{transform_indices = @transform_0, window_bounds = array<i64: 1>}, {transform_indices = @transform_1, window_bounds = array<i64: 1>}, {transform_indices = @transform_2, window_bounds = array<i64: 16, 128>}, {transform_indices = @transform_3, window_bounds = array<i64: 16, 128>}]} {
    %c0 = arith.constant 0 : index
    %c0_0 = arith.constant 0 : index
    %0 = vector.load %arg3[%c0, %c0_0] : memref<16x128xf32, #tpu.memory_space<vmem>>, vector<16x128xf32>
    %cst = arith.constant dense<0.000000e+00> : vector<16xf32>
    %1 = vector.multi_reduction <add>, %0, %cst [1] : vector<16x128xf32> to vector<16xf32>
    %2 = vector.shape_cast %1 : vector<16xf32> to vector<16x1xf32>
    %cst_1 = arith.constant 7.812500e-03 : f32
    %3 = vector.broadcast %cst_1 : f32 to vector<16x1xf32>
    %4 = arith.mulf %2, %3 : vector<16x1xf32>
    %5 = vector.broadcast %4 : vector<16x1xf32> to vector<16x128xf32>
    %6 = arith.subf %0, %5 : vector<16x128xf32>
    %7 = arith.mulf %6, %6 : vector<16x128xf32>
    %cst_2 = arith.constant dense<0.000000e+00> : vector<16xf32>
    %8 = vector.multi_reduction <add>, %7, %cst_2 [1] : vector<16x128xf32> to vector<16xf32>
    %9 = vector.shape_cast %8 : vector<16xf32> to vector<16x1xf32>
    %cst_3 = arith.constant 0.00787401571 : f32
    %10 = vector.broadcast %cst_3 : f32 to vector<16x1xf32>
    %11 = arith.mulf %9, %10 : vector<16x1xf32>
    %12 = math.sqrt %11 : vector<16x1xf32>
    %cst_4 = arith.constant 9.99999997E-7 : f32
    %13 = vector.broadcast %cst_4 : f32 to vector<16x1xf32>
    %14 = arith.addf %12, %13 : vector<16x1xf32>
    %15 = tpu.reciprocal %14 : vector<16x1xf32> -> vector<16x1xf32>
    %c0_5 = arith.constant 0 : index
    %16 = memref.load %arg1[%c0_5] : memref<1xf32, #tpu.memory_space<smem>>
    %17 = vector.broadcast %16 : f32 to vector<16x1xf32>
    %18 = arith.mulf %17, %15 : vector<16x1xf32>
    %19 = vector.broadcast %18 : vector<16x1xf32> to vector<16x128xf32>
    %20 = arith.mulf %6, %19 : vector<16x128xf32>
    %c0_6 = arith.constant 0 : index
    %21 = memref.load %arg2[%c0_6] : memref<1xf32, #tpu.memory_space<smem>>
    %22 = vector.broadcast %21 : f32 to vector<16x128xf32>
    %23 = arith.addf %20, %22 : vector<16x128xf32>
    %c0_7 = arith.constant 0 : index
    %c0_8 = arith.constant 0 : index
    %24 = vector.load %arg4[%c0_7, %c0_8] : memref<16x128xf32, #tpu.memory_space<vmem>>, vector<16x128xf32>
    tpu.vector_store %arg4[%c0_7, %c0_8], %23 {strides = array<i32>} : memref<16x128xf32, #tpu.memory_space<vmem>>, vector<16x128xf32>,
    return
  }
  func.func @transform_0(%arg0: i32) -> i32 {
    %c0_i32 = arith.constant 0 : i32
    %c0_i32_0 = arith.constant 0 : i32
    return %c0_i32 : i32
  }
  func.func @transform_1(%arg0: i32) -> i32 {
    %c0_i32 = arith.constant 0 : i32
    %c0_i32_0 = arith.constant 0 : i32
    return %c0_i32 : i32
  }
  func.func @transform_2(%arg0: i32) -> (i32, i32) {
    %c0_i32 = arith.constant 0 : i32
    %c0_i32_0 = arith.constant 0 : i32
    return %arg0, %c0_i32 : i32, i32
  }
  func.func @transform_3(%arg0: i32) -> (i32, i32) {
    %c0_i32 = arith.constant 0 : i32
    %c0_i32_0 = arith.constant 0 : i32
    return %arg0, %c0_i32 : i32, i32
  }
}

</mosaic_0001>

<llo_original>
// kernel: tpu_custom_call.1
$region0: #{tpu_custom_call.1}
  #allocation0 [shape = 'u32[]', space=smem, size = 0x4, offset = 0x4, fixed_abs, tag = 'smem constant byte address 0x4 - core index']
  #allocation1 [shape = 'u32[144,128]{1,0:T(1,128)}', space=vmem, size = 0x12000, scoped, tag = 'internal scratch']
  #allocation2 [shape = 'f32[1]{0:T(128)S(6)}', space=smem, size = 0x200, scoped, tag = 'scoped memory for tpu_custom_call.1']
  #allocation3 [shape = 'f32[1]{0:T(128)S(6)}', space=smem, size = 0x200, scoped, tag = 'scoped memory for tpu_custom_call.1']
  %s0 = inlined_call_operand.<no memory space> [shape: f32[1], index: 0, kind: input, shape index: {}]
  %s1 = inlined_call_operand.<no memory space> [shape: f32[1], index: 1, kind: input, shape index: {}]
  %s2 = inlined_call_operand.hbm [shape: f32[16,128], index: 2, kind: input, shape index: {}]
  %s3 = inlined_call_operand.hbm [shape: f32[16,128], index: 3, kind: output, shape index: {}]
  %s4 = sld [smem:[#allocation0]]
  $region26: #{tpu_custom_call.1} parent=0
    _
  %s6 = ssub.s32 1, %s4
  %s7 = scalar_select 0, %s6, %s4
  %8 = sst [smem:[#allocation2]] %s0
  %9 = sst [smem:[#allocation3]] %s1
  $region1: #{tpu_custom_call.1} parent=0
    #allocation4 [shape = 'u8[8192]{0}', space=vmem, size = 0x2000, scoped, tag = 'input window, operand 2, single buffered']
    #allocation5 [shape = 's32[1]{0}', space=sflag, size = 0x4, scoped, tag = 'scoped memory for tpu_custom_call.1']
    #allocation6 [shape = 's32[1]{0}', space=sflag, size = 0x4, scoped, tag = 'scoped memory for tpu_custom_call.1']
    #allocation7 [shape = 'u8[8192]{0}', space=vmem, size = 0x2000, scoped, tag = 'output window, operand 0, single buffered']
    %10 = vsyncpa [#allocation5], 0
    %11 = vsyncpa [#allocation6], 0
    // Predicated region
    $region2: #{tpu_custom_call.1} parent=1 // pred_check
      _
    $region3: #{tpu_custom_call.1} parent=1 // pred_check_branch
      %13 = sbr.rel (0) target = $region5
    $region4: #{tpu_custom_call.1} parent=1 // pred_region
      _
    $region5: #{tpu_custom_call.1} parent=1 // pred_fallthru
      _
    // Predicated region
    $region6: #{tpu_custom_call.1} parent=1 // pred_check
      _
    $region7: #{tpu_custom_call.1} parent=1 // pred_check_branch
      %15 = sbr.rel (0) target = $region9
    $region8: #{tpu_custom_call.1} parent=1 // pred_region
      _
    $region9: #{tpu_custom_call.1} parent=1 // pred_fallthru
      _
    // Predicated region
    $region10: #{tpu_custom_call.1} parent=1 // pred_check
      _
    $region11: #{tpu_custom_call.1} parent=1 // pred_check_branch
      %17 = sbr.rel (0) target = $region13
    $region12: #{tpu_custom_call.1} parent=1 // pred_region
      %s19 = ssub.s32 256, 256
      %20 = vsyncadd [#allocation5], %s19
      %s21 = sshll.u32 [#allocation4], 4
      %s22 = int_to_ptr.vmem [resolvable:$true] %s21
      %27 = dma.hbm_to_vmem [thread:$0]  %s2, 256, %s22, [#allocation5], 128, 128, 8
    $region13: #{tpu_custom_call.1} parent=1 // pred_fallthru
      _
    // Predicated region
    $region14: #{tpu_custom_call.1} parent=1 // pred_check
      _
    $region15: #{tpu_custom_call.1} parent=1 // pred_check_branch
      %29 = sbr.rel (0) target = $region17
    $region16: #{tpu_custom_call.1} parent=1 // pred_region
      %30 = dma.done [#allocation5], 256
    $region17: #{tpu_custom_call.1} parent=1 // pred_fallthru
      _
    %v31 = vld [vmem:[#allocation4] sm:$0xff]
    %v32 = vld [vmem:[#allocation4 + $0x8] sm:$0xff]
    %33 = vadd.xlane.f32.xlu0 %v31
    %v34 = vpop.xlane.xlu0 %33
    %35 = vadd.xlane.f32.xlu0 %v32
    %v36 = vpop.xlane.xlu0 %35
    %v37 = vmul.f32 %v34, 0.0078125
    %v38 = vmul.f32 %v36, 0.0078125
    %v39 = vsub.f32 %v31, %v37
    %v40 = vsub.f32 %v32, %v38
    %v41 = vmul.f32 %v39, %v39
    %v42 = vmul.f32 %v40, %v40
    %43 = vadd.xlane.f32.xlu0 %v41
    %v44 = vpop.xlane.xlu0 %43
    %45 = vadd.xlane.f32.xlu0 %v42
    %v46 = vpop.xlane.xlu0 %45
    %v47 = vmul.f32 %v44, 0.007874016
    %v48 = vmul.f32 %v46, 0.007874016
    %v49 = vrsqrt.pop %v47
    %v50 = vmul.f32 %v47, %v49
    %vm51 = vcmp.eq.f32.partialorder %v47, inf
    %v52 = vsel %vm51, %v47, %v50
    %vm53 = vcmp.eq.f32.partialorder %v47, 0.0
    %v54 = vand.u32 %v47, 2147483648
    %v55 = vsel %vm53, %v54, %v52
    %v56 = vrsqrt.pop %v48
    %v57 = vmul.f32 %v48, %v56
    %vm58 = vcmp.eq.f32.partialorder %v48, inf
    %v59 = vsel %vm58, %v48, %v57
    %vm60 = vcmp.eq.f32.partialorder %v48, 0.0
    %v61 = vand.u32 %v48, 2147483648
    %v62 = vsel %vm60, %v61, %v59
    %v63 = vadd.f32 %v55, 1e-06
    %v64 = vadd.f32 %v62, 1e-06
    %v65 = vrcp.pop %v63
    %v66 = vrcp.pop %v64
    %s67 = sld [smem:[#allocation2]]
    %v68 = vstv %s67
    %v69 = vmul.f32 %v68, %v65
    %v70 = vmul.f32 %v68, %v66
    %v71 = vmul.f32 %v39, %v69
    %v72 = vmul.f32 %v40, %v70
    %s73 = sld [smem:[#allocation3]]
    %v74 = vstv %s73
    %v75 = vadd.f32 %v71, %v74
    %v76 = vadd.f32 %v72, %v74
    %77 = vst [vmem:[#allocation7] sm:$0xff] %v75
    %78 = vst [vmem:[#allocation7 + $0x8] sm:$0xff] %v76
    // Predicated region
    $region18: #{tpu_custom_call.1} parent=1 // pred_check
      _
    $region19: #{tpu_custom_call.1} parent=1 // pred_check_branch
      %80 = sbr.rel (0) target = $region21
    $region20: #{tpu_custom_call.1} parent=1 // pred_region
      %s82 = ssub.s32 256, 256
      %83 = vsyncadd [#allocation6], %s82
      %s84 = sshll.u32 [#allocation7], 4
      %s85 = int_to_ptr.vmem [resolvable:$true] %s84
      %90 = dma.vmem_to_hbm [thread:$0]  %s85, 256, %s3, [#allocation6], 128, 128, 8
    $region21: #{tpu_custom_call.1} parent=1 // pred_fallthru
      _
    // Predicated region
    $region22: #{tpu_custom_call.1} parent=1 // pred_check
      _
    $region23: #{tpu_custom_call.1} parent=1 // pred_check_branch
      %92 = sbr.rel (0) target = $region25
    $region24: #{tpu_custom_call.1} parent=1 // pred_region
      %93 = dma.done [#allocation6], 256
    $region25: #{tpu_custom_call.1} parent=1 // pred_fallthru
      _
    %94 = vsyncpa [#allocation5], 1
    %95 = vsyncpa [#allocation6], 1

</llo_original>
